<compile_context>
chip_gen: v5e
topology: v5e:2x2
jax: 0.10.0
libtpu: 0.0.40
codegen_flags: <defaults>
</compile_context>

<pallas_src>
import jax
import jax.numpy as jnp
from jax.experimental import pallas as pl
from jax.experimental.pallas import tpu as pltpu


def _choose_batch_block(BAT, L, A, B, D, in_bytes, out_bytes):
    """Pick batch-rows-per-grid-step (BB) and a VMEM limit per TPU generation."""
    try:
        vmem_cap = int(pltpu.get_tpu_info().vmem_capacity_bytes)
    except Exception:
        vmem_cap = 64 * 1024 * 1024  # conservative (v7x per-core) if query fails
    vmem_limit = int(vmem_cap * 0.8)          # well under physical on every gen
    tile_budget = max(vmem_limit - (4 << 20), 1 << 20)  # fixed scratch allowance

    # Rough per-batch-row VMEM cost: double-buffered native-dtype embeddings
    # plus a modest fp32 temp allowance for the norm reduction, double-buffered
    # output plus the fp32 sim intermediate, plus the tiny token rows.
    per_row = ((A + B) * D * (2 * in_bytes + 4)
               + A * B * (2 * out_bytes + 4)
               + (A + B) * 4 * 2)
    bb_cap = max(1, tile_budget // max(per_row, 1))

    divisors = [d for d in range(1, BAT + 1) if BAT % d == 0]
    bb = max(d for d in divisors if d <= bb_cap)

    # Keep >= 2 total grid steps (and prefer an even count) so both v7x
    # TensorCores get work; shrinking BB only costs a little DMA efficiency.
    while bb > 1:
        steps = L * (BAT // bb)
        if steps >= 2 and steps % 2 == 0:
            break
        smaller = [d for d in divisors if d < bb]
        if not smaller:
            break
        bb = max(smaller)
    return bb, vmem_limit


def _stacked_simmat_pallas(a_emb, b_emb, query_tok, doc_tok, padding=0,
                           out_dtype=jnp.float32):
    """Cosine similarity matrices for all layers in one fused kernel.

    a_emb: (L, BAT, A, D), b_emb: (L, BAT, B, D) in their native dtype.
    query_tok: (BAT, A), doc_tok: (BAT, B) integer token ids.
    Returns (BAT, L, A, B) in out_dtype with padded-token rows/cols zeroed.

    Callers that already hold a stacked (L, BAT, ., D) hidden-states tensor
    should call this directly (zero-copy path).
    """
    L, BAT, A, D = a_emb.shape
    B = b_emb.shape[2]
    assert b_emb.shape[0] == L and b_emb.shape[1] == BAT and b_emb.shape[3] == D

    # Tokens pre-oriented to the layout they are consumed in inside the kernel.
    qtok = query_tok.astype(jnp.int32).reshape(BAT, A, 1)
    dtok = doc_tok.astype(jnp.int32).reshape(BAT, 1, B)

    in_bytes = jnp.dtype(a_emb.dtype).itemsize
    out_bytes = jnp.dtype(out_dtype).itemsize
    BB, vmem_limit = _choose_batch_block(BAT, L, A, B, D, in_bytes, out_bytes)
    grid = (BAT // BB, L)  # layer innermost: token blocks stay resident across L

    def kernel(a_ref, b_ref, qt_ref, dt_ref, o_ref):
        a = a_ref[...]                       # (BB, A, D) native dtype
        b = b_ref[...]                       # (BB, B, D)
        qt = qt_ref[...]                     # (BB, A, 1) int32
        dt = dt_ref[...]                     # (BB, 1, B) int32

        # L2 norms over the hidden dim in fp32; fold the padding mask into the
        # tiny per-row reciprocals so no full-(A, B) select/divide is needed.
        # (cast + square feed straight into the lane reduction)
        a32 = a.astype(jnp.float32)
        b32 = b.astype(jnp.float32)
        inv_a = 1.0 / (jnp.sqrt(jnp.sum(a32 * a32, axis=2, keepdims=True)) + 1e-9)
        inv_b = 1.0 / (jnp.sqrt(jnp.sum(b32 * b32, axis=2)) + 1e-9)
        inv_a = jnp.where(qt == padding, 0.0, inv_a)               # (BB, A, 1)
        inv_b = jnp.where(dt == padding, 0.0, inv_b[:, None, :])   # (BB, 1, B)

        # Batched a @ b^T on the MXU with fp32 accumulation.
        sim = jnp.einsum("bad,bkd->bak", a, b,
                         preferred_element_type=jnp.float32)       # (BB, A, B)
        o_ref[...] = (sim * inv_a * inv_b).astype(o_ref.dtype)

    return pl.pallas_call(
        kernel,
        out_shape=jax.ShapeDtypeStruct((BAT, L, A, B), out_dtype),
        grid_spec=pltpu.PrefetchScalarGridSpec(
            num_scalar_prefetch=0,
            grid=grid,
            in_specs=[
                pl.BlockSpec((None, BB, A, D), lambda i, l: (l, i, 0, 0)),
                pl.BlockSpec((None, BB, B, D), lambda i, l: (l, i, 0, 0)),
                pl.BlockSpec((BB, A, 1), lambda i, l: (i, 0, 0)),
                pl.BlockSpec((BB, 1, B), lambda i, l: (i, 0, 0)),
            ],
            out_specs=pl.BlockSpec((BB, None, A, B), lambda i, l: (i, l, 0, 0)),
        ),
        compiler_params=pltpu.CompilerParams(
            dimension_semantics=("parallel", "parallel"),
            vmem_limit_bytes=vmem_limit,
        ),
    )(a_emb, b_emb, qtok, dtok)


def stacked_similarity_matrix(query_embed, doc_embed, query_tok, doc_tok,
                              padding=0, out_dtype=jnp.float32):
    """JAX/Pallas equivalent of StackedSimilarityMatrix.forward."""
    assert type(query_embed) == type(doc_embed)
    if not isinstance(query_embed, (list, tuple)):
        query_embed, doc_embed = [query_embed], [doc_embed]
    query_embed, doc_embed = list(query_embed), list(doc_embed)

    def _uniform(xs):
        return all(x is not None and x.shape == xs[0].shape and x.dtype == xs[0].dtype
                   for x in xs)

    if (all(a is not None and b is not None for a, b in zip(query_embed, doc_embed))
            and _uniform(query_embed) and _uniform(doc_embed)):
        # Fast path: all layers fused into one pallas_call writing the stacked
        # (BAT, L, A, B) output directly.  (If the caller already has the
        # hidden states stacked as (L, BAT, ., D), call _stacked_simmat_pallas
        # directly and skip this jnp.stack copy.)
        a_stack = jnp.stack(query_embed, axis=0)   # (L, BAT, A, D)
        b_stack = jnp.stack(doc_embed, axis=0)     # (L, BAT, B, D)
        return _stacked_simmat_pallas(a_stack, b_stack, query_tok, doc_tok,
                                      padding=padding, out_dtype=out_dtype)

    # Mixed / exact-token-match fallback (rare path).
    sims = []
    for a_emb, b_emb in zip(query_embed, doc_embed):
        if a_emb is None and b_emb is None:
            # TODO(synk): exact token-match branch (embeddings == None) kept in
            # plain JAX; it is a trivial elementwise equality.
            sim = (query_tok[:, :, None] == doc_tok[:, None, :]).astype(out_dtype)
            sim = jnp.where(query_tok[:, :, None] == padding, 0.0, sim)
            sim = jnp.where(doc_tok[:, None, :] == padding, 0.0, sim)
        else:
            sim = _stacked_simmat_pallas(a_emb[None], b_emb[None], query_tok,
                                         doc_tok, padding=padding,
                                         out_dtype=out_dtype)[:, 0]
        sims.append(sim)
    return jnp.stack(sims, axis=1)


def _reference(query_embed, doc_embed, query_tok, doc_tok, padding=0):
    """Plain-JAX reference mirroring the torch semantics (fp32 math)."""
    sims = []
    for a, b in zip(query_embed, doc_embed):
        a = a.astype(jnp.float32)
        b = b.astype(jnp.float32)
        a_den = jnp.linalg.norm(a, axis=2)[:, :, None] + 1e-9
        b_den = jnp.linalg.norm(b, axis=2)[:, None, :] + 1e-9
        sim = jnp.einsum("bad,bkd->bak", a, b) / (a_den * b_den)
        sim = jnp.where(query_tok[:, :, None] == padding, 0.0, sim)
        sim = jnp.where(doc_tok[:, None, :] == padding, 0.0, sim)
        sims.append(sim)
    return jnp.stack(sims, axis=1)


if __name__ == "__main__":
    key = jax.random.PRNGKey(0)
    k1, k2, k3, k4, k5, k6 = jax.random.split(key, 6)

    BAT, A, B, D, L = 2, 8, 16, 32, 2
    PADDING = 0

    # Two "layers" of bf16 embeddings (native dtype kept all the way to the MXU).
    q_emb = [
        jax.random.normal(k1, (BAT, A, D), jnp.bfloat16),
        jax.random.normal(k2, (BAT, A, D), jnp.bfloat16),
    ]
    d_emb = [
        jax.random.normal(k3, (BAT, B, D), jnp.bfloat16),
        jax.random.normal(k4, (BAT, B, D), jnp.bfloat16),
    ]
    # Tokens in [0, 5) so that value 0 (== padding) occurs and masking is exercised.
    q_tok = jax.random.randint(k5, (BAT, A), 0, 5, jnp.int32)
    d_tok = jax.random.randint(k6, (BAT, B), 0, 5, jnp.int32)

    out = stacked_similarity_matrix(q_emb, d_emb, q_tok, d_tok, padding=PADDING)
    out = jax.block_until_ready(out)

    ref = _reference(q_emb, d_emb, q_tok, d_tok, padding=PADDING)
    assert out.shape == (BAT, L, A, B), out.shape
    assert jnp.allclose(out, ref, atol=1e-3, rtol=1e-3), "mismatch vs reference"

    print("KERNEL_OK")
</pallas_src>

<mosaic_0001>
module attributes {stable_mosaic.version = 11 : i64} {
  func.func @kernel(%arg0: i32, %arg1: i32, %arg2: memref<1x2x8x32xbf16, #tpu.memory_space<vmem>>, %arg3: memref<1x2x16x32xbf16, #tpu.memory_space<vmem>>, %arg4: memref<2x8x1xi32, #tpu.memory_space<vmem>>, %arg5: memref<2x1x16xi32, #tpu.memory_space<vmem>>, %arg6: memref<2x1x8x16xf32, #tpu.memory_space<vmem>>) attributes {dimension_semantics = [#tpu.dimension_semantics<parallel>, #tpu.dimension_semantics<parallel>], iteration_bounds = array<i64: 1, 2>, scalar_prefetch = 0 : i64, scratch_operands = 0 : i64, tpu.core_type = #tpu.core_type<tc>, window_params = [{transform_indices = @transform_0, window_bounds = array<i64: 1, 2, 8, 32>}, {transform_indices = @transform_1, window_bounds = array<i64: 1, 2, 16, 32>}, {transform_indices = @transform_2, window_bounds = array<i64: 2, 8, 1>}, {transform_indices = @transform_3, window_bounds = array<i64: 2, 1, 16>}, {transform_indices = @transform_4, window_bounds = array<i64: 2, 1, 8, 16>}]} {
    %c0 = arith.constant 0 : index
    %c0_0 = arith.constant 0 : index
    %c0_1 = arith.constant 0 : index
    %c0_2 = arith.constant 0 : index
    %0 = vector.load %arg2[%c0, %c0_0, %c0_1, %c0_2] : memref<1x2x8x32xbf16, #tpu.memory_space<vmem>>, vector<1x2x8x32xbf16>
    %1 = vector.shape_cast %0 : vector<1x2x8x32xbf16> to vector<2x8x32xbf16>
    %c0_3 = arith.constant 0 : index
    %c0_4 = arith.constant 0 : index
    %c0_5 = arith.constant 0 : index
    %c0_6 = arith.constant 0 : index
    %2 = vector.load %arg3[%c0_3, %c0_4, %c0_5, %c0_6] : memref<1x2x16x32xbf16, #tpu.memory_space<vmem>>, vector<1x2x16x32xbf16>
    %3 = vector.shape_cast %2 : vector<1x2x16x32xbf16> to vector<2x16x32xbf16>
    %c0_7 = arith.constant 0 : index
    %c0_8 = arith.constant 0 : index
    %c0_9 = arith.constant 0 : index
    %4 = vector.load %arg4[%c0_7, %c0_8, %c0_9] : memref<2x8x1xi32, #tpu.memory_space<vmem>>, vector<2x8x1xi32>
    %c0_10 = arith.constant 0 : index
    %c0_11 = arith.constant 0 : index
    %c0_12 = arith.constant 0 : index
    %5 = vector.load %arg5[%c0_10, %c0_11, %c0_12] : memref<2x1x16xi32, #tpu.memory_space<vmem>>, vector<2x1x16xi32>
    %6 = arith.extf %1 : vector<2x8x32xbf16> to vector<2x8x32xf32>
    %7 = arith.extf %3 : vector<2x16x32xbf16> to vector<2x16x32xf32>
    %8 = arith.mulf %6, %6 : vector<2x8x32xf32>
    %cst = arith.constant dense<0.000000e+00> : vector<2x8xf32>
    %9 = vector.multi_reduction <add>, %8, %cst [2] : vector<2x8x32xf32> to vector<2x8xf32>
    %10 = vector.shape_cast %9 : vector<2x8xf32> to vector<2x8x1xf32>
    %11 = math.sqrt %10 : vector<2x8x1xf32>
    %cst_13 = arith.constant 9.99999971E-10 : f32
    %12 = vector.broadcast %cst_13 : f32 to vector<2x8x1xf32>
    %13 = arith.addf %11, %12 : vector<2x8x1xf32>
    %cst_14 = arith.constant 1.000000e+00 : f32
    %14 = vector.broadcast %cst_14 : f32 to vector<2x8x1xf32>
    %15 = arith.divf %14, %13 : vector<2x8x1xf32>
    %16 = arith.mulf %7, %7 : vector<2x16x32xf32>
    %cst_15 = arith.constant dense<0.000000e+00> : vector<2x16xf32>
    %17 = vector.multi_reduction <add>, %16, %cst_15 [2] : vector<2x16x32xf32> to vector<2x16xf32>
    %18 = math.sqrt %17 : vector<2x16xf32>
    %cst_16 = arith.constant 9.99999971E-10 : f32
    %19 = vector.broadcast %cst_16 : f32 to vector<2x16xf32>
    %20 = arith.addf %18, %19 : vector<2x16xf32>
    %cst_17 = arith.constant 1.000000e+00 : f32
    %21 = vector.broadcast %cst_17 : f32 to vector<2x16xf32>
    %22 = arith.divf %21, %20 : vector<2x16xf32>
    %c0_i32 = arith.constant 0 : i32
    %23 = vector.broadcast %c0_i32 : i32 to vector<2x8x1xi32>
    %24 = arith.cmpi eq, %4, %23 : vector<2x8x1xi32>
    %cst_18 = arith.constant 0.000000e+00 : f32
    %25 = vector.broadcast %cst_18 : f32 to vector<2x8x1xf32>
    %26 = arith.select %24, %25, %15 : vector<2x8x1xi1>, vector<2x8x1xf32>
    %c0_i32_19 = arith.constant 0 : i32
    %27 = vector.broadcast %c0_i32_19 : i32 to vector<2x1x16xi32>
    %28 = arith.cmpi eq, %5, %27 : vector<2x1x16xi32>
    %29 = vector.shape_cast %22 : vector<2x16xf32> to vector<2x1x16xf32>
    %cst_20 = arith.constant 0.000000e+00 : f32
    %30 = vector.broadcast %cst_20 : f32 to vector<2x1x16xf32>
    %31 = arith.select %28, %30, %29 : vector<2x1x16xi1>, vector<2x1x16xf32>
    "tpu.trace_start"() <{level = 10 : i32, message = "bad,bkd->bak"}> : () -> ()
    %cst_21 = arith.constant dense<0.000000e+00> : vector<2x8x16xf32>
    %32 = tpu.matmul %1, %3, %cst_21 {dimension_numbers = #tpu.dot_dimension_numbers<[2], [2], [1], [1], [0, 0, 0, 1, 1, 1], [0], [0]>} : vector<2x8x32xbf16>, vector<2x16x32xbf16>, vector<2x8x16xf32> -> vector<2x8x16xf32>
    "tpu.trace_stop"() : () -> ()
    %33 = vector.broadcast %26 : vector<2x8x1xf32> to vector<2x8x16xf32>
    %34 = arith.mulf %32, %33 : vector<2x8x16xf32>
    %35 = vector.broadcast %31 : vector<2x1x16xf32> to vector<2x8x16xf32>
    %36 = arith.mulf %34, %35 : vector<2x8x16xf32>
    %c0_22 = arith.constant 0 : index
    %c0_23 = arith.constant 0 : index
    %c0_24 = arith.constant 0 : index
    %c0_25 = arith.constant 0 : index
    %37 = vector.load %arg6[%c0_22, %c0_23, %c0_24, %c0_25] : memref<2x1x8x16xf32, #tpu.memory_space<vmem>>, vector<2x1x8x16xf32>
    %38 = vector.shape_cast %37 : vector<2x1x8x16xf32> to vector<2x8x16xf32>
    %39 = vector.shape_cast %36 : vector<2x8x16xf32> to vector<2x1x8x16xf32>
    tpu.vector_store %arg6[%c0_22, %c0_23, %c0_24, %c0_25], %39 {strides = array<i32>} : memref<2x1x8x16xf32, #tpu.memory_space<vmem>>, vector<2x1x8x16xf32>,
    return
  }
  func.func @transform_0(%arg0: i32, %arg1: i32) -> (i32, i32, i32, i32) {
    %c0_i32 = arith.constant 0 : i32
    %c0_i32_0 = arith.constant 0 : i32
    %c0_i32_1 = arith.constant 0 : i32
    return %arg1, %arg0, %c0_i32, %c0_i32_0 : i32, i32, i32, i32
  }
  func.func @transform_1(%arg0: i32, %arg1: i32) -> (i32, i32, i32, i32) {
    %c0_i32 = arith.constant 0 : i32
    %c0_i32_0 = arith.constant 0 : i32
    %c0_i32_1 = arith.constant 0 : i32
    return %arg1, %arg0, %c0_i32, %c0_i32_0 : i32, i32, i32, i32
  }
  func.func @transform_2(%arg0: i32, %arg1: i32) -> (i32, i32, i32) {
    %c0_i32 = arith.constant 0 : i32
    %c0_i32_0 = arith.constant 0 : i32
    %c0_i32_1 = arith.constant 0 : i32
    return %arg0, %c0_i32, %c0_i32_0 : i32, i32, i32
  }
  func.func @transform_3(%arg0: i32, %arg1: i32) -> (i32, i32, i32) {
    %c0_i32 = arith.constant 0 : i32
    %c0_i32_0 = arith.constant 0 : i32
    %c0_i32_1 = arith.constant 0 : i32
    return %arg0, %c0_i32, %c0_i32_0 : i32, i32, i32
  }
  func.func @transform_4(%arg0: i32, %arg1: i32) -> (i32, i32, i32, i32) {
    %c0_i32 = arith.constant 0 : i32
    %c0_i32_0 = arith.constant 0 : i32
    %c0_i32_1 = arith.constant 0 : i32
    return %arg0, %arg1, %c0_i32, %c0_i32_0 : i32, i32, i32, i32
  }
}

</mosaic_0001>

<llo_original>
// kernel: tpu_custom_call.1
$region0: #{tpu_custom_call.1}
  #allocation0 [shape = 'u32[]', space=smem, size = 0x4, offset = 0x4, fixed_abs, tag = 'smem constant byte address 0x4 - core index']
  #allocation1 [shape = 'u32[72,128]{1,0:T(1,128)}', space=vmem, size = 0x9000, scoped, tag = 'internal scratch']
  %s0 = inlined_call_operand.vmem [shape: bf16[2,2,8,32], index: 0, kind: input, shape index: {}]
  %s1 = inlined_call_operand.hbm [shape: bf16[2,2,16,32], index: 1, kind: input, shape index: {}]
  %s2 = inlined_call_operand.vmem [shape: s32[2,8,1], index: 2, kind: input, shape index: {}]
  %s3 = inlined_call_operand.vmem [shape: s32[2,1,16], index: 3, kind: input, shape index: {}]
  %s4 = inlined_call_operand.hbm [shape: f32[2,2,8,16], index: 4, kind: output, shape index: {}]
  %s5 = sld [smem:[#allocation0]]
  $region53: #{tpu_custom_call.1} parent=0
    _
  %s7 = ssub.s32 1, %s5
  %s8 = scalar_select 0, %s7, %s5
  $region1: #{tpu_custom_call.1} parent=0
    #allocation2 [shape = 'u8[16384]{0}', space=vmem, size = 0x4000, scoped, tag = 'input window, operand 1']
    #allocation3 [shape = 's32[2]{0}', space=sflag, size = 0x8, scoped, tag = 'scoped memory for tpu_custom_call.1']
    #allocation4 [shape = 's32[2]{0}', space=sflag, size = 0x8, scoped, tag = 'scoped memory for tpu_custom_call.1']
    #allocation5 [shape = 'u8[16384]{0}', space=vmem, size = 0x4000, scoped, tag = 'output window, operand 0']
    %9 = vsyncpa [#allocation3], 0
    %s10 = scalar_lea.sflag [#allocation3], 1
    %11 = vsyncpa %s10, 0
    %12 = vsyncpa [#allocation4], 0
    %s13 = scalar_lea.sflag [#allocation4], 1
    %14 = vsyncpa %s13, 0
    loop: start=0, step=1, limit=4
    $region2: #{tpu_custom_call.1} parent=1 // loop_pre_header
      _
    $region3: #{tpu_custom_call.1} parent=1 // loop_header
      %s16 = sphi 0, %s20
      %p17 = scmp.ge.s32.totalorder %s16, 4
      %s23 = sphi 0, %s35
      %s24 = sphi 0, %s31
      %s25 = sphi 0, %s23
      %s26 = sphi 0, %s24
      %s27 = sphi 0, %s25
      %s28 = sphi 0, %s26
      %s40 = sphi 0, %s42
      %s43 = sphi 0, %s40
      %s44 = sphi 0, %s43
      %s60 = sphi 0, %s44
      %s68 = sphi 0, %s70
      %s71 = sphi 0, %s68
      %s72 = sphi 0, %s71
      %s88 = sphi 0, %s72
      %s94 = sphi 0, %s96
      %s97 = sphi 0, %s94
      %s98 = sphi 0, %s97
      %s114 = sphi 0, %s98
      %s120 = sphi 0, %s122
      %s123 = sphi 0, %s120
      %s124 = sphi 0, %s123
      %s140 = sphi 0, %s124
      %s148 = sphi 0, %s150
      %s151 = sphi 0, %s148
      %s152 = sphi 0, %s151
      %s168 = sphi 0, %s152
    $region4: #{tpu_custom_call.1} parent=1 // loop_header_branch
      %19 = sbr.rel (%p17) target = $region8
    $region5: #{tpu_custom_call.1} parent=1 // loop_body
      %s21 = ssub.s32 %s16, 1
      %s22 = ssub.s32 %s16, 2
      %s29 = sadd.s32 1, %s24
      %p30 = scmp.ge.s32.totalorder %s29, 2
      %s31 = scalar_select %p30, 0, %s29
      %s32 = sadd.s32 1, %s23
      %s33 = scalar_select %p30, %s32, %s23
      %p34 = scmp.ge.s32.totalorder %s33, 1
      %s35 = scalar_select %p34, 0, %s33
      %s36 = ssub.s32 %s24, %s31
      %s37 = ssub.s32 %s23, %s35
      %s38 = sor.u32 %s36, %s37
      %p39 = scmp.eq.s32.totalorder %s38, 0
      %s41 = sadd.s32 %s40, 1
      %s42 = scalar_select %p39, %s40, %s41
      %p45 = pneg %p39
      %p46 = scmp.eq.s32.totalorder %s16, 1
      %p47 = por %p45, %p46
      %p48 = scmp.ne.s32.totalorder %s40, %s43
      %p49 = scmp.eq.s32.totalorder %s16, 0
      %p50 = por %p48, %p49
      %p51 = scmp.ne.s32.totalorder %s40, %s43
      %p52 = scmp.eq.s32.totalorder %s21, 1
      %p53 = por %p51, %p52
      %p54 = scmp.ne.s32.totalorder %s43, %s44
      %p55 = scmp.eq.s32.totalorder %s21, 0
      %p56 = por %p54, %p55
      %p57 = scmp.ne.s32.totalorder %s43, %s44
      %p58 = scmp.eq.s32.totalorder %s22, 1
      %p59 = por %p57, %p58
      %p61 = scmp.ne.s32.totalorder %s44, %s60
      %p62 = scmp.eq.s32.totalorder %s22, 0
      %p63 = por %p61, %p62
      %s64 = ssub.s32 %s24, %s31
      %s65 = ssub.s32 %s23, %s35
      %s66 = sor.u32 %s64, %s65
      %p67 = scmp.eq.s32.totalorder %s66, 0
      %s69 = sadd.s32 %s68, 1
      %s70 = scalar_select %p67, %s68, %s69
      %p73 = pneg %p67
      %p74 = scmp.eq.s32.totalorder %s16, 1
      %p75 = por %p73, %p74
      %p76 = scmp.ne.s32.totalorder %s68, %s71
      %p77 = scmp.eq.s32.totalorder %s16, 0
      %p78 = por %p76, %p77
      %p79 = scmp.ne.s32.totalorder %s68, %s71
      %p80 = scmp.eq.s32.totalorder %s21, 1
      %p81 = por %p79, %p80
      %p82 = scmp.ne.s32.totalorder %s71, %s72
      %p83 = scmp.eq.s32.totalorder %s21, 0
      %p84 = por %p82, %p83
      %p85 = scmp.ne.s32.totalorder %s71, %s72
      %p86 = scmp.eq.s32.totalorder %s22, 1
      %p87 = por %p85, %p86
      %p89 = scmp.ne.s32.totalorder %s72, %s88
      %p90 = scmp.eq.s32.totalorder %s22, 0
      %p91 = por %p89, %p90
      %s92 = ssub.s32 %s23, %s35
      %p93 = scmp.eq.s32.totalorder %s92, 0
      %s95 = sadd.s32 %s94, 1
      %s96 = scalar_select %p93, %s94, %s95
      %p99 = pneg %p93
      %p100 = scmp.eq.s32.totalorder %s16, 1
      %p101 = por %p99, %p100
      %p102 = scmp.ne.s32.totalorder %s94, %s97
      %p103 = scmp.eq.s32.totalorder %s16, 0
      %p104 = por %p102, %p103
      %p105 = scmp.ne.s32.totalorder %s94, %s97
      %p106 = scmp.eq.s32.totalorder %s21, 1
      %p107 = por %p105, %p106
      %p108 = scmp.ne.s32.totalorder %s97, %s98
      %p109 = scmp.eq.s32.totalorder %s21, 0
      %p110 = por %p108, %p109
      %p111 = scmp.ne.s32.totalorder %s97, %s98
      %p112 = scmp.eq.s32.totalorder %s22, 1
      %p113 = por %p111, %p112
      %p115 = scmp.ne.s32.totalorder %s98, %s114
      %p116 = scmp.eq.s32.totalorder %s22, 0
      %p117 = por %p115, %p116
      %s118 = ssub.s32 %s23, %s35
      %p119 = scmp.eq.s32.totalorder %s118, 0
      %s121 = sadd.s32 %s120, 1
      %s122 = scalar_select %p119, %s120, %s121
      %p125 = pneg %p119
      %p126 = scmp.eq.s32.totalorder %s16, 1
      %p127 = por %p125, %p126
      %p128 = scmp.ne.s32.totalorder %s120, %s123
      %p129 = scmp.eq.s32.totalorder %s16, 0
      %p130 = por %p128, %p129
      %p131 = scmp.ne.s32.totalorder %s120, %s123
      %p132 = scmp.eq.s32.totalorder %s21, 1
      %p133 = por %p131, %p132
      %p134 = scmp.ne.s32.totalorder %s123, %s124
      %p135 = scmp.eq.s32.totalorder %s21, 0
      %p136 = por %p134, %p135
      %p137 = scmp.ne.s32.totalorder %s123, %s124
      %p138 = scmp.eq.s32.totalorder %s22, 1
      %p139 = por %p137, %p138
      %p141 = scmp.ne.s32.totalorder %s124, %s140
      %p142 = scmp.eq.s32.totalorder %s22, 0
      %p143 = por %p141, %p142
      %s144 = ssub.s32 %s23, %s35
      %s145 = ssub.s32 %s24, %s31
      %s146 = sor.u32 %s144, %s145
      %p147 = scmp.eq.s32.totalorder %s146, 0
      %s149 = sadd.s32 %s148, 1
      %s150 = scalar_select %p147, %s148, %s149
      %p153 = pneg %p147
      %p154 = scmp.eq.s32.totalorder %s16, 1
      %p155 = por %p153, %p154
      %p156 = scmp.ne.s32.totalorder %s148, %s151
      %p157 = scmp.eq.s32.totalorder %s16, 0
      %p158 = por %p156, %p157
      %p159 = scmp.ne.s32.totalorder %s148, %s151
      %p160 = scmp.eq.s32.totalorder %s21, 1
      %p161 = por %p159, %p160
      %p162 = scmp.ne.s32.totalorder %s151, %s152
      %p163 = scmp.eq.s32.totalorder %s21, 0
      %p164 = por %p162, %p163
      %p165 = scmp.ne.s32.totalorder %s151, %s152
      %p166 = scmp.eq.s32.totalorder %s22, 1
      %p167 = por %p165, %p166
      %p169 = scmp.ne.s32.totalorder %s152, %s168
      %p170 = scmp.eq.s32.totalorder %s22, 0
      %p171 = por %p169, %p170
      %p172 = scmp.le.s32.totalorder 1, %s16
      %p173 = scmp.lt.s32.totalorder %s16, 3
      %p174 = pnand %p172, %p173
      %p175 = pneg %p174
      // Predicated region
      $region9: #{tpu_custom_call.1} parent=5 // pred_check
        _
      $region10: #{tpu_custom_call.1} parent=5 // pred_check_branch
        %177 = sbr.rel (%p174) target = $region12
      $region11: #{tpu_custom_call.1} parent=5 // pred_region
        %s178 = ssub.s32 %s16, 1
        // Predicated region
        $region13: #{tpu_custom_call.1} parent=11 // pred_check
          %p179 = pneg %p110
        $region14: #{tpu_custom_call.1} parent=11 // pred_check_branch
          %181 = sbr.rel (%p179) target = $region16
        $region15: #{tpu_custom_call.1} parent=11 // pred_region
          %s182 = smul.u32 2, %s25
          %p183 = scmp.lt.s32.totalorder %s182, 1
          %s184 = scalar_select %p183, %s182, 1
          %s185 = smul.addr %s184, 8
          %s186 = scalar_lea.vmem %s2, %s185
          %s187 = smul.u32 2, %s25
        $region16: #{tpu_custom_call.1} parent=11 // pred_fallthru
          _
        // Predicated region
        $region17: #{tpu_custom_call.1} parent=11 // pred_check
          %p188 = pneg %p136
        $region18: #{tpu_custom_call.1} parent=11 // pred_check_branch
          %190 = sbr.rel (%p188) target = $region20
        $region19: #{tpu_custom_call.1} parent=11 // pred_region
          %s191 = smul.u32 2, %s25
          %p192 = scmp.lt.s32.totalorder %s191, 1
          %s193 = scalar_select %p192, %s191, 1
          %s194 = scalar_lea.vmem %s3, %s193
          %s195 = smul.u32 2, %s25
        $region20: #{tpu_custom_call.1} parent=11 // pred_fallthru
          _
      $region12: #{tpu_custom_call.1} parent=5 // pred_fallthru
        _
      %p196 = scmp.lt.s32.totalorder %s16, 2
      // Predicated region
      $region21: #{tpu_custom_call.1} parent=5 // pred_check
        %p197 = pneg %p196
      $region22: #{tpu_custom_call.1} parent=5 // pred_check_branch
        %199 = sbr.rel (%p197) target = $region24
      $region23: #{tpu_custom_call.1} parent=5 // pred_region
        // Predicated region
        $region25: #{tpu_custom_call.1} parent=23 // pred_check
          %p200 = pneg %p50
        $region26: #{tpu_custom_call.1} parent=23 // pred_check_branch
          %202 = sbr.rel (%p200) target = $region28
        $region27: #{tpu_custom_call.1} parent=23 // pred_region
          %s203 = smul.u32 2, %s23
          %p204 = scmp.lt.s32.totalorder %s24, 1
          %s205 = scalar_select %p204, %s24, 1
          %p206 = scmp.lt.s32.totalorder %s203, 1
          %s207 = scalar_select %p206, %s203, 1
          %s208 = smul.addr %s205, 2
          %s209 = sadd.s32 %s207, %s208
          %s210 = smul.addr %s209, 4
          %s211 = scalar_lea.vmem %s0, %s210
          %s212 = smul.u32 2, %s23
        $region28: #{tpu_custom_call.1} parent=23 // pred_fallthru
          _
        // Predicated region
        $region29: #{tpu_custom_call.1} parent=23 // pred_check
          %p213 = pneg %p78
        $region30: #{tpu_custom_call.1} parent=23 // pred_check_branch
          %215 = sbr.rel (%p213) target = $region32
        $region31: #{tpu_custom_call.1} parent=23 // pred_region
          %s216 = sand.u32 %s68, 1
          %s217 = scalar_lea.sflag [#allocation3], %s216
          %s218 = sand.u32 %s68, 1
          %s219 = smul.addr %s218, 16
          %s220 = scalar_lea.vmem [#allocation2], %s219
          %s221 = smul.u32 2, %s23
          %223 = vsyncadd %s217, 0
          %s224 = smul.addr %s221, 2
          %s225 = smul.addr %s24, 4
          %s226 = sadd.s32 %s224, %s225
          %s227 = smul.addr %s226, 4
          %s228 = scalar_lea.hbm %s1, %s227
          %s229 = sshll.u32 %s228, 4
          %s230 = int_to_ptr.hbm [resolvable:$true] %s229
          %s231 = sshll.u32 %s220, 4
          %s232 = int_to_ptr.vmem [resolvable:$true] %s231
          %237 = dma.hbm_to_vmem [thread:$0]  %s230, 256, %s232, %s217, 64, 64, 4
        $region32: #{tpu_custom_call.1} parent=23 // pred_fallthru
          _
      $region24: #{tpu_custom_call.1} parent=5 // pred_fallthru
        _
      %p238 = scmp.le.s32.totalorder 1, %s16
      %p239 = scmp.lt.s32.totalorder %s16, 3
      %p240 = pnand %p238, %p239
      %p241 = pneg %p240
      // Predicated region
      $region33: #{tpu_custom_call.1} parent=5 // pred_check
        _
      $region34: #{tpu_custom_call.1} parent=5 // pred_check_branch
        %243 = sbr.rel (%p240) target = $region36
      $region35: #{tpu_custom_call.1} parent=5 // pred_region
        %s244 = ssub.s32 %s16, 1
        %s245 = sand.u32 %s71, 1
        %s246 = scalar_lea.sflag [#allocation3], %s245
        %s247 = sand.u32 %s71, 1
        %s248 = smul.addr %s247, 16
        %s249 = scalar_lea.vmem [#allocation2], %s248
        // Predicated region
        $region37: #{tpu_custom_call.1} parent=35 // pred_check
          %p250 = pneg %p84
        $region38: #{tpu_custom_call.1} parent=35 // pred_check_branch
          %252 = sbr.rel (%p250) target = $region40
        $region39: #{tpu_custom_call.1} parent=35 // pred_region
          %254 = dma.done %s246, 256
        $region40: #{tpu_custom_call.1} parent=35 // pred_fallthru
          _
        %s255 = smul.u32 2, %s25
        %p256 = scmp.lt.s32.totalorder %s26, 1
        %s257 = scalar_select %p256, %s26, 1
        %p258 = scmp.lt.s32.totalorder %s255, 1
        %s259 = scalar_select %p258, %s255, 1
        %s260 = smul.addr %s257, 2
        %s261 = sadd.s32 %s259, %s260
        %s262 = smul.addr %s261, 4
        %s263 = scalar_lea.vmem %s0, %s262
        %p264 = pneg %p56
        %p265 = pneg %p53
        %s266 = sand.u32 %s71, 1
        %s267 = scalar_lea.sflag [#allocation3], %s266
        %s268 = sand.u32 %s71, 1
        %s269 = smul.addr %s268, 16
        %s270 = scalar_lea.vmem [#allocation2], %s269
        %p271 = pneg %p84
        %p272 = pneg %p81
        %s273 = smul.u32 2, %s25
        %p274 = scmp.lt.s32.totalorder %s273, 1
        %s275 = scalar_select %p274, %s273, 1
        %s276 = smul.addr %s275, 8
        %s277 = scalar_lea.vmem %s2, %s276
        %p278 = pneg %p110
        %p279 = pneg %p107
        %s280 = smul.u32 2, %s25
        %p281 = scmp.lt.s32.totalorder %s280, 1
        %s282 = scalar_select %p281, %s280, 1
        %s283 = scalar_lea.vmem %s3, %s282
        %p284 = pneg %p136
        %p285 = pneg %p133
        %p286 = pneg %p164
        %p287 = pneg %p161
        %s288 = sand.u32 %s151, 1
        %s289 = scalar_lea.sflag [#allocation4], %s288
        %s290 = sand.u32 %s151, 1
        %s291 = smul.addr %s290, 16
        %s292 = scalar_lea.vmem [#allocation5], %s291
        %s293 = smul.u32 2, %s25
        %p294 = scmp.lt.s32.totalorder %s26, 1
        %s295 = scalar_select %p294, %s26, 1
        %p296 = scmp.lt.s32.totalorder %s293, 1
        %s297 = scalar_select %p296, %s293, 1
        %s298 = smul.addr %s295, 2
        %s299 = sadd.s32 %s297, %s298
        %s300 = smul.addr %s299, 4
        %s301 = scalar_lea.vmem %s0, %s300
        %s302 = smul.u32 2, %s25
        %s303 = smul.u32 2, %s25
        %s304 = smul.u32 2, %s25
        %p305 = scmp.lt.s32.totalorder %s304, 1
        %s306 = scalar_select %p305, %s304, 1
        %s307 = smul.addr %s306, 8
        %s308 = scalar_lea.vmem %s2, %s307
        %s309 = smul.u32 2, %s25
        %s310 = smul.u32 2, %s25
        %p311 = scmp.lt.s32.totalorder %s310, 1
        %s312 = scalar_select %p311, %s310, 1
        %s313 = scalar_lea.vmem %s3, %s312
        %s314 = smul.u32 2, %s25
        %s315 = smul.u32 2, %s25
        %v317 = vld [vmem:[%s301] sm:$0xf]
        %v318 = vld [vmem:[%s301 + $0x4] sm:$0xf]
        %v319 = vld [vmem:[%s249] sm:$0xf]
        %v320 = vld [vmem:[%s249 + $0x4] sm:$0xf]
        %v321 = vld [vmem:[%s249 + $0x8] sm:$0xf]
        %v322 = vld [vmem:[%s249 + $0xc] sm:$0xf]
        %v323 = vld [vmem:[%s308] sm:$0xff]
        %v324 = vld [vmem:[%s308 + $0x8] sm:$0xff]
        %v325 = vld [vmem:[%s313] sm:$0x1]
        %v326 = vld [vmem:[%s313 + $0x1] sm:$0x1]
        %v327 = vunpack.c.l.bf16 %v317
        %v328 = vunpack.c.l.bf16 %v318
        %v329 = vunpack.c.l.bf16 %v319
        %v330 = vunpack.c.l.bf16 %v320
        %v331 = vunpack.c.l.bf16 %v321
        %v332 = vunpack.c.l.bf16 %v322
        %v333 = vmul.f32 %v327, %v327
        %v334 = vmul.f32 %v328, %v328
        %vm335 = vcmask 261120
        %v336 = vsel %vm335, %v333, 0.0
        %337 = vadd.xlane.f32.xlu0 %v336
        %v338 = vpop.xlane.xlu0 %337
        %v339 = vsel %vm335, %v334, 0.0
        %340 = vadd.xlane.f32.xlu0 %v339
        %v341 = vpop.xlane.xlu0 %340
        %v342 = vrsqrt.pop %v338
        %v343 = vmul.f32 %v342, %v338
        %v344 = vmul.f32 %v343, %v342
        %v345 = vmul.f32 0.5, %v344
        %v346 = vsub.f32 1.5, %v345
        %v347 = vmul.f32 %v342, %v346
        %v348 = vmul.f32 %v338, %v347
        %vm349 = vcmp.eq.f32.partialorder %v338, inf
        %v350 = vsel %vm349, %v338, %v348
        %vm351 = vcmp.eq.f32.partialorder %v338, 0.0
        %v352 = vand.u32 %v338, 2147483648
        %v353 = vsel %vm351, %v352, %v350
        %v354 = vrsqrt.pop %v341
        %v355 = vmul.f32 %v354, %v341
        %v356 = vmul.f32 %v355, %v354
        %v357 = vmul.f32 0.5, %v356
        %v358 = vsub.f32 1.5, %v357
        %v359 = vmul.f32 %v354, %v358
        %v360 = vmul.f32 %v341, %v359
        %vm361 = vcmp.eq.f32.partialorder %v341, inf
        %v362 = vsel %vm361, %v341, %v360
        %vm363 = vcmp.eq.f32.partialorder %v341, 0.0
        %v364 = vand.u32 %v341, 2147483648
        %v365 = vsel %vm363, %v364, %v362
        %v366 = vadd.f32 %v353, 1e-09
        %v367 = vadd.f32 %v365, 1e-09
        %v368 = vrcp.pop %v366
        %v369 = vmul.f32 %v366, %v368
        %v370 = vsub.f32 1.0, %v369
        %v371 = vmul.f32 %v368, %v370
        %v372 = vadd.f32 %v368, %v371
        %vm373 = vweird.f32 %v366
        %vm374 = vweird.f32 %v368
        %vm375 = vmor %vm373, %vm374
        %v376 = vsel %vm375, %v368, %v372
        %v377 = vand.u32 2147483647, %v366
        %vm378 = vcmp.eq.f32.partialorder %v377, 8.507059e+37
        %v379 = vand.u32 %v366, 2147483648
        %v380 = vor.u32 1.1754944e-38, %v379
        %v381 = vsel %vm378, %v380, %v376
        %v382 = vmul.f32 1.0, %v381
        %v383 = vrcp.pop %v367
        %v384 = vmul.f32 %v367, %v383
        %v385 = vsub.f32 1.0, %v384
        %v386 = vmul.f32 %v383, %v385
        %v387 = vadd.f32 %v383, %v386
        %vm388 = vweird.f32 %v367
        %vm389 = vweird.f32 %v383
        %vm390 = vmor %vm388, %vm389
        %v391 = vsel %vm390, %v383, %v387
        %v392 = vand.u32 2147483647, %v367
        %vm393 = vcmp.eq.f32.partialorder %v392, 8.507059e+37
        %v394 = vand.u32 %v367, 2147483648
        %v395 = vor.u32 1.1754944e-38, %v394
        %v396 = vsel %vm393, %v395, %v391
        %v397 = vmul.f32 1.0, %v396
        %v398 = vmul.f32 %v329, %v329
        %v399 = vmul.f32 %v330, %v330
        %v400 = vmul.f32 %v331, %v331
        %v401 = vmul.f32 %v332, %v332
        %v402 = vsel %vm335, %v398, 0.0
        %403 = vadd.xlane.f32.xlu0 %v402
        %v404 = vpop.xlane.xlu0 %403
        %v405 = vsel %vm335, %v399, 0.0
        %406 = vadd.xlane.f32.xlu0 %v405
        %v407 = vpop.xlane.xlu0 %406
        %v408 = vsel %vm335, %v400, 0.0
        %409 = vadd.xlane.f32.xlu0 %v408
        %v410 = vpop.xlane.xlu0 %409
        %v411 = vsel %vm335, %v401, 0.0
        %412 = vadd.xlane.f32.xlu0 %v411
        %v413 = vpop.xlane.xlu0 %412
        %v414 = vrsqrt.pop %v404
        %v415 = vmul.f32 %v414, %v404
        %v416 = vmul.f32 %v415, %v414
        %v417 = vmul.f32 0.5, %v416
        %v418 = vsub.f32 1.5, %v417
        %v419 = vmul.f32 %v414, %v418
        %v420 = vmul.f32 %v404, %v419
        %vm421 = vcmp.eq.f32.partialorder %v404, inf
        %v422 = vsel %vm421, %v404, %v420
        %vm423 = vcmp.eq.f32.partialorder %v404, 0.0
        %v424 = vand.u32 %v404, 2147483648
        %v425 = vsel %vm423, %v424, %v422
        %v426 = vrsqrt.pop %v407
        %v427 = vmul.f32 %v426, %v407
        %v428 = vmul.f32 %v427, %v426
        %v429 = vmul.f32 0.5, %v428
        %v430 = vsub.f32 1.5, %v429
        %v431 = vmul.f32 %v426, %v430
        %v432 = vmul.f32 %v407, %v431
        %vm433 = vcmp.eq.f32.partialorder %v407, inf
        %v434 = vsel %vm433, %v407, %v432
        %vm435 = vcmp.eq.f32.partialorder %v407, 0.0
        %v436 = vand.u32 %v407, 2147483648
        %v437 = vsel %vm435, %v436, %v434
        %v438 = vrsqrt.pop %v410
        %v439 = vmul.f32 %v438, %v410
        %v440 = vmul.f32 %v439, %v438
        %v441 = vmul.f32 0.5, %v440
        %v442 = vsub.f32 1.5, %v441
        %v443 = vmul.f32 %v438, %v442
        %v444 = vmul.f32 %v410, %v443
        %vm445 = vcmp.eq.f32.partialorder %v410, inf
        %v446 = vsel %vm445, %v410, %v444
        %vm447 = vcmp.eq.f32.partialorder %v410, 0.0
        %v448 = vand.u32 %v410, 2147483648
        %v449 = vsel %vm447, %v448, %v446
        %v450 = vrsqrt.pop %v413
        %v451 = vmul.f32 %v450, %v413
        %v452 = vmul.f32 %v451, %v450
        %v453 = vmul.f32 0.5, %v452
        %v454 = vsub.f32 1.5, %v453
        %v455 = vmul.f32 %v450, %v454
        %v456 = vmul.f32 %v413, %v455
        %vm457 = vcmp.eq.f32.partialorder %v413, inf
        %v458 = vsel %vm457, %v413, %v456
        %vm459 = vcmp.eq.f32.partialorder %v413, 0.0
        %v460 = vand.u32 %v413, 2147483648
        %v461 = vsel %vm459, %v460, %v458
        %v462 = vadd.f32 %v425, 1e-09
        %v463 = vadd.f32 %v437, 1e-09
        %v464 = vadd.f32 %v449, 1e-09
        %v465 = vadd.f32 %v461, 1e-09
        %v466 = vrcp.pop %v462
        %v467 = vmul.f32 %v462, %v466
        %v468 = vsub.f32 1.0, %v467
        %v469 = vmul.f32 %v466, %v468
        %v470 = vadd.f32 %v466, %v469
        %vm471 = vweird.f32 %v462
        %vm472 = vweird.f32 %v466
        %vm473 = vmor %vm471, %vm472
        %v474 = vsel %vm473, %v466, %v470
        %v475 = vand.u32 2147483647, %v462
        %vm476 = vcmp.eq.f32.partialorder %v475, 8.507059e+37
        %v477 = vand.u32 %v462, 2147483648
        %v478 = vor.u32 1.1754944e-38, %v477
        %v479 = vsel %vm476, %v478, %v474
        %v480 = vmul.f32 1.0, %v479
        %v481 = vrcp.pop %v463
        %v482 = vmul.f32 %v463, %v481
        %v483 = vsub.f32 1.0, %v482
        %v484 = vmul.f32 %v481, %v483
        %v485 = vadd.f32 %v481, %v484
        %vm486 = vweird.f32 %v463
        %vm487 = vweird.f32 %v481
        %vm488 = vmor %vm486, %vm487
        %v489 = vsel %vm488, %v481, %v485
        %v490 = vand.u32 2147483647, %v463
        %vm491 = vcmp.eq.f32.partialorder %v490, 8.507059e+37
        %v492 = vand.u32 %v463, 2147483648
        %v493 = vor.u32 1.1754944e-38, %v492
        %v494 = vsel %vm491, %v493, %v489
        %v495 = vmul.f32 1.0, %v494
        %v496 = vrcp.pop %v464
        %v497 = vmul.f32 %v464, %v496
        %v498 = vsub.f32 1.0, %v497
        %v499 = vmul.f32 %v496, %v498
        %v500 = vadd.f32 %v496, %v499
        %vm501 = vweird.f32 %v464
        %vm502 = vweird.f32 %v496
        %vm503 = vmor %vm501, %vm502
        %v504 = vsel %vm503, %v496, %v500
        %v505 = vand.u32 2147483647, %v464
        %vm506 = vcmp.eq.f32.partialorder %v505, 8.507059e+37
        %v507 = vand.u32 %v464, 2147483648
        %v508 = vor.u32 1.1754944e-38, %v507
        %v509 = vsel %vm506, %v508, %v504
        %v510 = vmul.f32 1.0, %v509
        %v511 = vrcp.pop %v465
        %v512 = vmul.f32 %v465, %v511
        %v513 = vsub.f32 1.0, %v512
        %v514 = vmul.f32 %v511, %v513
        %v515 = vadd.f32 %v511, %v514
        %vm516 = vweird.f32 %v465
        %vm517 = vweird.f32 %v511
        %vm518 = vmor %vm516, %vm517
        %v519 = vsel %vm518, %v511, %v515
        %v520 = vand.u32 2147483647, %v465
        %vm521 = vcmp.eq.f32.partialorder %v520, 8.507059e+37
        %v522 = vand.u32 %v465, 2147483648
        %v523 = vor.u32 1.1754944e-38, %v522
        %v524 = vsel %vm521, %v523, %v519
        %v525 = vmul.f32 1.0, %v524
        %vm526 = vcmp.eq.s32.totalorder %v323, 0
        %vm527 = vcmp.eq.s32.totalorder %v324, 0
        %v528 = vsel %vm526, 0.0, %v382
        %v529 = vsel %vm527, 0.0, %v397
        %vm530 = vcmp.eq.s32.totalorder %v325, 0
        %vm531 = vcmp.eq.s32.totalorder %v326, 0
        %v536 = vperm.slane %v480, 0
        %v537 = vperm.slane %v480, 1
        %v538 = vperm.slane %v480, 2
        %v539 = vperm.slane %v480, 3
        %v540 = vperm.slane %v480, 4
        %v541 = vperm.slane %v480, 5
        %v542 = vperm.slane %v480, 6
        %v543 = vperm.slane %v480, 7
        %v544 = vperm.slane %v495, 0
        %v545 = vperm.slane %v495, 1
        %v546 = vperm.slane %v495, 2
        %v547 = vperm.slane %v495, 3
        %v548 = vperm.slane %v495, 4
        %v549 = vperm.slane %v495, 5
        %v550 = vperm.slane %v495, 6
        %v551 = vperm.slane %v495, 7
        %v552 = vperm.slane %v510, 0
        %v553 = vperm.slane %v510, 1
        %v554 = vperm.slane %v510, 2
        %v555 = vperm.slane %v510, 3
        %v556 = vperm.slane %v510, 4
        %v557 = vperm.slane %v510, 5
        %v558 = vperm.slane %v510, 6
        %v559 = vperm.slane %v510, 7
        %v560 = vperm.slane %v525, 0
        %v561 = vperm.slane %v525, 1
        %v562 = vperm.slane %v525, 2
        %v563 = vperm.slane %v525, 3
        %v564 = vperm.slane %v525, 4
        %v565 = vperm.slane %v525, 5
        %v566 = vperm.slane %v525, 6
        %v567 = vperm.slane %v525, 7
        %568 = vst [vmem:[#allocation1] ss:$9 sm:$0xff] %v536
        %s569 = scalar_lea.vmem [#allocation1], 1
        %570 = vst [vmem:[%s569] ss:$9 sm:$0xff] %v537
        %s571 = scalar_lea.vmem [#allocation1], 2
        %572 = vst [vmem:[%s571] ss:$9 sm:$0xff] %v538
        %s573 = scalar_lea.vmem [#allocation1], 3
        %574 = vst [vmem:[%s573] ss:$9 sm:$0xff] %v539
        %s575 = scalar_lea.vmem [#allocation1], 4
        %576 = vst [vmem:[%s575] ss:$9 sm:$0xff] %v540
        %s577 = scalar_lea.vmem [#allocation1], 5
        %578 = vst [vmem:[%s577] ss:$9 sm:$0xff] %v541
        %s579 = scalar_lea.vmem [#allocation1], 6
        %580 = vst [vmem:[%s579] ss:$9 sm:$0xff] %v542
        %s581 = scalar_lea.vmem [#allocation1], 7
        %582 = vst [vmem:[%s581] ss:$9 sm:$0xff] %v543
        %v583 = vld [vmem:[#allocation1] sm:$0xff]
        %584 = vst [vmem:[#allocation1] ss:$9 sm:$0xff] %v544
        %585 = vst [vmem:[%s569] ss:$9 sm:$0xff] %v545
        %586 = vst [vmem:[%s571] ss:$9 sm:$0xff] %v546
        %587 = vst [vmem:[%s573] ss:$9 sm:$0xff] %v547
        %588 = vst [vmem:[%s575] ss:$9 sm:$0xff] %v548
        %589 = vst [vmem:[%s577] ss:$9 sm:$0xff] %v549
        %590 = vst [vmem:[%s579] ss:$9 sm:$0xff] %v550
        %591 = vst [vmem:[%s581] ss:$9 sm:$0xff] %v551
        %v592 = vld [vmem:[#allocation1] sm:$0xff]
        %593 = vst [vmem:[#allocation1] ss:$9 sm:$0xff] %v552
        %594 = vst [vmem:[%s569] ss:$9 sm:$0xff] %v553
        %595 = vst [vmem:[%s571] ss:$9 sm:$0xff] %v554
        %596 = vst [vmem:[%s573] ss:$9 sm:$0xff] %v555
        %597 = vst [vmem:[%s575] ss:$9 sm:$0xff] %v556
        %598 = vst [vmem:[%s577] ss:$9 sm:$0xff] %v557
        %599 = vst [vmem:[%s579] ss:$9 sm:$0xff] %v558
        %600 = vst [vmem:[%s581] ss:$9 sm:$0xff] %v559
        %v601 = vld [vmem:[#allocation1] sm:$0xff]
        %602 = vst [vmem:[#allocation1] ss:$9 sm:$0xff] %v560
        %603 = vst [vmem:[%s569] ss:$9 sm:$0xff] %v561
        %604 = vst [vmem:[%s571] ss:$9 sm:$0xff] %v562
        %605 = vst [vmem:[%s573] ss:$9 sm:$0xff] %v563
        %606 = vst [vmem:[%s575] ss:$9 sm:$0xff] %v564
        %607 = vst [vmem:[%s577] ss:$9 sm:$0xff] %v565
        %608 = vst [vmem:[%s579] ss:$9 sm:$0xff] %v566
        %609 = vst [vmem:[%s581] ss:$9 sm:$0xff] %v567
        %v610 = vld [vmem:[#allocation1] sm:$0xff]
        %611 = vset.pattern.permute.xlu0 0
        %612 = vperm.xlu0 %611, %v583
        %v613 = vpop.permute.xlu0 %612
        %614 = vset.pattern.permute.xlu0 0
        %615 = vperm.xlu0 %614, %v592
        %v616 = vpop.permute.xlu0 %615
        %617 = vset.pattern.permute.xlu0 0
        %618 = vperm.xlu0 %617, %v601
        %v619 = vpop.permute.xlu0 %618
        %620 = vset.pattern.permute.xlu0 0
        %621 = vperm.xlu0 %620, %v610
        %v622 = vpop.permute.xlu0 %621
        %v623 = vlaneseq
        %v624 = vand.u32 %v623, 127
        %v625 = vperm.slane %v613, %v624
        %v626 = vadd.s32 %v624, 4294967288
        %v627 = vperm.slane %v616, %v626
        %vm628 = vcmask 130112
        %v629 = vsel %vm628, %v627, %v625
        %v630 = vperm.slane %v619, %v624
        %v631 = vperm.slane %v622, %v626
        %v632 = vsel %vm628, %v631, %v630
        %v635 = vsel %vm530, 0.0, %v629
        %v636 = vsel %vm531, 0.0, %v632
        %v639 = vunpack.c.l.b16 %v319
        %v640 = vunpack.c.l.b16 %v320
        %v641 = vpack.c.b16 %v640, %v639
        %v643 = vsel %vm335, %v317, 0
        %v646 = vsel %vm335, %v641, 0
        %648 = vmatpush.bf16.xpose.msra.mxu0 0
        %649 = vmatpush.bf16.xpose.msra.mxu0 0
        %650 = vmatpush.bf16.xpose.msra.mxu0 0
        %651 = vmatpush.bf16.xpose.msra.mxu0 0
        %652 = vmatpush.bf16.xpose.msra.mxu0 0
        %653 = vmatpush.bf16.xpose.msra.mxu0 0
        %654 = vmatpush.bf16.xpose.msra.mxu0 0
        %655 = vmatpush.bf16.xpose.msra.mxu0 %v646
        %656 = vmatmul.bf16.gmra.mxu0 %v643
        %v657 = vpop.f32.mrf.mxu0
        %v658 = vadd.f32 0.0, %v657
        %v659 = vpop.f32.mrf.mxu0
        %660 = vdwg.mxu0
        %v663 = vunpack.c.l.b16 %v321
        %v664 = vunpack.c.l.b16 %v322
        %v665 = vpack.c.b16 %v664, %v663
        %v667 = vsel %vm335, %v318, 0
        %v670 = vsel %vm335, %v665, 0
        %672 = vmatpush.bf16.xpose.msra.mxu0 0
        %673 = vmatpush.bf16.xpose.msra.mxu0 0
        %674 = vmatpush.bf16.xpose.msra.mxu0 0
        %675 = vmatpush.bf16.xpose.msra.mxu0 0
        %676 = vmatpush.bf16.xpose.msra.mxu0 0
        %677 = vmatpush.bf16.xpose.msra.mxu0 0
        %678 = vmatpush.bf16.xpose.msra.mxu0 0
        %679 = vmatpush.bf16.xpose.msra.mxu0 %v670
        %680 = vmatmul.bf16.gmra.mxu0 %v667
        %v681 = vpop.f32.mrf.mxu0
        %v682 = vadd.f32 0.0, %v681
        %v683 = vpop.f32.mrf.mxu0
        %684 = vdwg.mxu0
        %686 = vset.pattern.permute.xlu0 0
        %687 = vperm.xlu0 %686, %v528
        %v688 = vpop.permute.xlu0 %687
        %691 = vset.pattern.permute.xlu0 0
        %692 = vperm.xlu0 %691, %v529
        %v693 = vpop.permute.xlu0 %692
        %v695 = vmul.f32 %v658, %v688
        %v696 = vmul.f32 %v682, %v693
        %v699 = vperm.slane %v635, 0
        %v700 = vperm.slane %v636, 0
        %v703 = vmul.f32 %v695, %v699
        %v704 = vmul.f32 %v696, %v700
        %vm705 = vcmask 130048
        %706 = vst.msk [vmem:[%s292] sm:$0xff] %vm705, %v703
        %707 = vst.msk [vmem:[%s292 + $0x8] sm:$0xff] %vm705, %v704
        %s708 = sand.u32 %s151, 1
        %s709 = scalar_lea.sflag [#allocation4], %s708
        %s710 = sand.u32 %s151, 1
        %s711 = smul.addr %s710, 16
        %s712 = scalar_lea.vmem [#allocation5], %s711
        // Predicated region
        $region41: #{tpu_custom_call.1} parent=35 // pred_check
          %p713 = pneg %p161
        $region42: #{tpu_custom_call.1} parent=35 // pred_check_branch
          %715 = sbr.rel (%p713) target = $region44
        $region43: #{tpu_custom_call.1} parent=35 // pred_region
          %s716 = smul.u32 2, %s25
          %718 = vsyncadd %s709, 0
          %s719 = smul.addr %s716, 2
          %s720 = sadd.s32 %s26, %s719
          %s721 = smul.addr %s720, 8
          %s722 = scalar_lea.hbm %s4, %s721
          %s723 = sshll.u32 %s712, 4
          %s724 = int_to_ptr.vmem [resolvable:$true] %s723
          %s725 = sshll.u32 %s722, 4
          %s726 = int_to_ptr.hbm [resolvable:$true] %s725
          %731 = dma.vmem_to_hbm [thread:$0]  %s724, 256, %s726, %s709, 128, 256, 8
        $region44: #{tpu_custom_call.1} parent=35 // pred_fallthru
          _
      $region36: #{tpu_custom_call.1} parent=5 // pred_fallthru
        _
      %p732 = scmp.le.s32.totalorder 2, %s16
      // Predicated region
      $region45: #{tpu_custom_call.1} parent=5 // pred_check
        %p733 = pneg %p732
      $region46: #{tpu_custom_call.1} parent=5 // pred_check_branch
        %735 = sbr.rel (%p733) target = $region48
      $region47: #{tpu_custom_call.1} parent=5 // pred_region
        %s736 = ssub.s32 %s16, 2
        // Predicated region
        $region49: #{tpu_custom_call.1} parent=47 // pred_check
          %p737 = pneg %p167
        $region50: #{tpu_custom_call.1} parent=47 // pred_check_branch
          %739 = sbr.rel (%p737) target = $region52
        $region51: #{tpu_custom_call.1} parent=47 // pred_region
          %s740 = sand.u32 %s152, 1
          %s741 = scalar_lea.sflag [#allocation4], %s740
          %s742 = sand.u32 %s152, 1
          %s743 = smul.addr %s742, 16
          %s744 = scalar_lea.vmem [#allocation5], %s743
          %746 = dma.done %s741, 256
        $region52: #{tpu_custom_call.1} parent=47 // pred_fallthru
          _
      $region48: #{tpu_custom_call.1} parent=5 // pred_fallthru
        _
    $region6: #{tpu_custom_call.1} parent=1 // loop_footer
      %s20 = sadd.s32 1, %s16
    $region7: #{tpu_custom_call.1} parent=1 // loop_footer_branch
      %15 = sbr.rel target = $region3
    $region8: #{tpu_custom_call.1} parent=1 // loop_exit
      _
    %747 = vsyncpa [#allocation3], 1
    %s748 = scalar_lea.sflag [#allocation3], 1
    %749 = vsyncpa %s748, 1
    %750 = vsyncpa [#allocation4], 1
    %s751 = scalar_lea.sflag [#allocation4], 1
    %752 = vsyncpa %s751, 1

</llo_original>
